<compile_context>
chip_gen: v5e
topology: v5e:2x2
jax: 0.10.0
libtpu: 0.0.40
codegen_flags: <defaults>
</compile_context>

<pallas_src>
import jax
import jax.numpy as jnp
from jax.experimental import pallas as pl
from jax.experimental.pallas import tpu as pltpu

_LANE = 128
_SMALL_ROWS = 512           # <= 256 KiB f32: single full-extent block
_DEFAULT_BLOCK_ROWS = 8192  # 4 MiB f32 tiles for the large streaming path


def _round_up(a, m):
    return ((a + m - 1) // m) * m


def _sublane_multiple(dtype):
    # Sublane packing: f32 -> 8, bf16/f16 -> 16, int8/fp8 -> 32.
    itemsize = jnp.dtype(dtype).itemsize
    return 8 * max(4 // max(itemsize, 1), 1)


def _pick_tile_rows(rows, block_rows, sub):
    if rows <= _SMALL_ROWS:
        # Tiny: one full-extent block; per-step overhead would dominate.
        return rows
    if rows <= 2 * block_rows:
        # Medium: at least 2 blocks so both v7x TensorCores get work.
        return min(_round_up(-(-rows // 2), sub), rows)
    # Large: big tiles to amortize per-step overhead (still < VMEM limits).
    return block_rows


def _sine_kernel(params_ref, x_ref, o_ref):
    # params_ref (SMEM): [A, omega, phi, B], f32 scalars.
    A = params_ref[0]
    omega = params_ref[1]
    phi = params_ref[2]
    B = params_ref[3]
    # Load native dtype, compute in f32 in-register, store back native.
    x = x_ref[...].astype(jnp.float32)
    o_ref[...] = (A * jnp.sin(omega * x + phi) + B).astype(o_ref.dtype)


def sine_params(A, omega, phi, B):
    """Pack the four module parameters into one (4,) f32 array (do this once)."""
    return jnp.stack(
        [
            jnp.asarray(A, jnp.float32).reshape(()),
            jnp.asarray(omega, jnp.float32).reshape(()),
            jnp.asarray(phi, jnp.float32).reshape(()),
            jnp.asarray(B, jnp.float32).reshape(()),
        ]
    )


def sine_module(x, A=None, omega=None, phi=None, B=None, *, params=None,
                block_rows=_DEFAULT_BLOCK_ROWS):
    """y = A*sin(omega*x + phi) + B elementwise via a Pallas TPU kernel.

    Either pass the scalars A/omega/phi/B, or a precomputed `params`
    array from `sine_params(...)` (preferred in a hot loop).
    """
    if params is None:
        params = sine_params(A, omega, phi, B)

    orig_shape = x.shape
    dtype = x.dtype
    n = x.size

    x_flat = jnp.reshape(x, (-1,))
    n_main = (n // _LANE) * _LANE
    rem = n - n_main

    out_main = None
    if n_main > 0:
        rows = n_main // _LANE
        x_main = x_flat if rem == 0 else jax.lax.slice(x_flat, (0,), (n_main,))
        x2d = jnp.reshape(x_main, (rows, _LANE))

        tile_rows = _pick_tile_rows(rows, block_rows, _sublane_multiple(dtype))
        grid = (pl.cdiv(rows, tile_rows),)

        out2d = pl.pallas_call(
            _sine_kernel,
            out_shape=jax.ShapeDtypeStruct((rows, _LANE), dtype),
            grid_spec=pltpu.PrefetchScalarGridSpec(
                num_scalar_prefetch=0,
                grid=grid,
                in_specs=[
                    pl.BlockSpec(memory_space=pltpu.SMEM),               # params (4,)
                    pl.BlockSpec((tile_rows, _LANE), lambda i: (i, 0)),  # x slab
                ],
                out_specs=pl.BlockSpec((tile_rows, _LANE), lambda i: (i, 0)),
            ),
            compiler_params=pltpu.CompilerParams(
                # Shards the row-tile axis across TensorCores on megacore parts
                # (v7x); harmless on single-TC v5e/v6e.
                dimension_semantics=("parallel",),
            ),
        )(params, x2d)
        out_main = jnp.reshape(out2d, (n_main,))

    if rem:
        # <128-element tail: tiny JAX epilogue instead of a full-array pad+slice.
        tail = x_flat[n_main:].astype(jnp.float32)
        tail_out = (params[0] * jnp.sin(params[1] * tail + params[2])
                    + params[3]).astype(dtype)
        out_flat = tail_out if out_main is None else jnp.concatenate(
            [out_main, tail_out])
    else:
        out_flat = out_main

    return jnp.reshape(out_flat, orig_shape)


if __name__ == "__main__":
    key = jax.random.PRNGKey(0)
    kx, ka, kw, kp, kb = jax.random.split(key, 5)

    # Deterministic parameters mirroring random_uniform(0, 1) in __init__.
    A = jax.random.uniform(ka, (), minval=0.0, maxval=1.0)
    omega = jax.random.uniform(kw, (), minval=0.0, maxval=1.0)
    phi = jax.random.uniform(kp, (), minval=0.0, maxval=1.0)
    B = jax.random.uniform(kb, (), minval=0.0, maxval=1.0)
    params = sine_params(A, omega, phi, B)   # hoisted out of the hot path

    # Small NCHW input, consistent with a generic elementwise module.
    x = jax.random.normal(kx, (2, 4, 16, 16), dtype=jnp.float32)

    y = sine_module(x, params=params)
    y = jax.block_until_ready(y)

    # Reference check in plain JAX.
    y_ref = A * jnp.sin(omega * x + phi) + B
    assert y.shape == x.shape and y.dtype == x.dtype
    assert jnp.allclose(y, y_ref, atol=1e-6, rtol=1e-6)

    print("KERNEL_OK")
</pallas_src>

<mosaic_0001>
module attributes {stable_mosaic.version = 11 : i64} {
  func.func @_sine_kernel(%arg0: i32, %arg1: memref<4xf32, #tpu.memory_space<smem>>, %arg2: memref<16x128xf32, #tpu.memory_space<vmem>>, %arg3: memref<16x128xf32, #tpu.memory_space<vmem>>) attributes {dimension_semantics = [#tpu.dimension_semantics<parallel>], iteration_bounds = array<i64: 1>, scalar_prefetch = 0 : i64, scratch_operands = 0 : i64, tpu.core_type = #tpu.core_type<tc>, window_params = [{transform_indices = @transform_0, window_bounds = array<i64: 4>}, {transform_indices = @transform_1, window_bounds = array<i64: 16, 128>}, {transform_indices = @transform_2, window_bounds = array<i64: 16, 128>}]} {
    %c0 = arith.constant 0 : index
    %0 = memref.load %arg1[%c0] : memref<4xf32, #tpu.memory_space<smem>>
    %c1 = arith.constant 1 : index
    %1 = memref.load %arg1[%c1] : memref<4xf32, #tpu.memory_space<smem>>
    %c2 = arith.constant 2 : index
    %2 = memref.load %arg1[%c2] : memref<4xf32, #tpu.memory_space<smem>>
    %c3 = arith.constant 3 : index
    %3 = memref.load %arg1[%c3] : memref<4xf32, #tpu.memory_space<smem>>
    %c0_0 = arith.constant 0 : index
    %c0_1 = arith.constant 0 : index
    %4 = vector.load %arg2[%c0_0, %c0_1] : memref<16x128xf32, #tpu.memory_space<vmem>>, vector<16x128xf32>
    %5 = vector.broadcast %1 : f32 to vector<16x128xf32>
    %6 = arith.mulf %5, %4 : vector<16x128xf32>
    %7 = vector.broadcast %2 : f32 to vector<16x128xf32>
    %8 = arith.addf %6, %7 : vector<16x128xf32>
    %9 = math.sin %8 : vector<16x128xf32>
    %10 = vector.broadcast %0 : f32 to vector<16x128xf32>
    %11 = arith.mulf %10, %9 : vector<16x128xf32>
    %12 = vector.broadcast %3 : f32 to vector<16x128xf32>
    %13 = arith.addf %11, %12 : vector<16x128xf32>
    %c0_2 = arith.constant 0 : index
    %c0_3 = arith.constant 0 : index
    %14 = vector.load %arg3[%c0_2, %c0_3] : memref<16x128xf32, #tpu.memory_space<vmem>>, vector<16x128xf32>
    tpu.vector_store %arg3[%c0_2, %c0_3], %13 {strides = array<i32>} : memref<16x128xf32, #tpu.memory_space<vmem>>, vector<16x128xf32>,
    return
  }
  func.func @transform_0(%arg0: i32) -> i32 {
    %c0_i32 = arith.constant 0 : i32
    %c0_i32_0 = arith.constant 0 : i32
    return %c0_i32 : i32
  }
  func.func @transform_1(%arg0: i32) -> (i32, i32) {
    %c0_i32 = arith.constant 0 : i32
    %c0_i32_0 = arith.constant 0 : i32
    return %arg0, %c0_i32 : i32, i32
  }
  func.func @transform_2(%arg0: i32) -> (i32, i32) {
    %c0_i32 = arith.constant 0 : i32
    %c0_i32_0 = arith.constant 0 : i32
    return %arg0, %c0_i32 : i32, i32
  }
}

</mosaic_0001>

<llo_original>
// kernel: tpu_custom_call.1
$region0: #{tpu_custom_call.1}
  #allocation0 [shape = 'u32[]', space=smem, size = 0x4, offset = 0x4, fixed_abs, tag = 'smem constant byte address 0x4 - core index']
  #allocation1 [shape = 'u32[72,128]{1,0:T(1,128)}', space=vmem, size = 0x9000, scoped, tag = 'internal scratch']
  %s0 = inlined_call_operand.hbm [shape: f32[4], index: 0, kind: input, shape index: {}]
  %s1 = inlined_call_operand.hbm [shape: f32[16,128], index: 1, kind: input, shape index: {}]
  %s2 = inlined_call_operand.hbm [shape: f32[16,128], index: 2, kind: output, shape index: {}]
  %s3 = sld [smem:[#allocation0]]
  $region26: #{tpu_custom_call.1} parent=0
    _
  %s5 = ssub.s32 1, %s3
  %s6 = scalar_select 0, %s5, %s3
  $region1: #{tpu_custom_call.1} parent=0
    #allocation2 [shape = 'u8[512]{0}', space=smem, size = 0x200, scoped, tag = 'input window, operand 0, single buffered']
    #allocation3 [shape = 's32[1]{0}', space=sflag, size = 0x4, scoped, tag = 'scoped memory for tpu_custom_call.1']
    #allocation4 [shape = 's32[1]{0}', space=sflag, size = 0x4, scoped, tag = 'scoped memory for tpu_custom_call.1']
    #allocation5 [shape = 's32[1]{0}', space=sflag, size = 0x4, scoped, tag = 'scoped memory for tpu_custom_call.1']
    #allocation6 [shape = 'u8[8192]{0}', space=vmem, size = 0x2000, scoped, tag = 'input window, operand 1, single buffered']
    #allocation7 [shape = 'u8[8192]{0}', space=vmem, size = 0x2000, scoped, tag = 'output window, operand 0, single buffered']
    %7 = vsyncpa [#allocation5], 0
    %8 = vsyncpa [#allocation3], 0
    %9 = vsyncpa [#allocation4], 0
    // Predicated region
    $region2: #{tpu_custom_call.1} parent=1 // pred_check
      _
    $region3: #{tpu_custom_call.1} parent=1 // pred_check_branch
      %11 = sbr.rel (0) target = $region5
    $region4: #{tpu_custom_call.1} parent=1 // pred_region
      %13 = vsyncadd [#allocation5], 0
      %s15 = sshll.u32 %s0, 4
      %s16 = int_to_ptr.hbm [resolvable:$true] %s15
      %18 = dma.hbm_to_smem %s16, 16, [#allocation2], [#allocation5]
    $region5: #{tpu_custom_call.1} parent=1 // pred_fallthru
      _
    // Predicated region
    $region6: #{tpu_custom_call.1} parent=1 // pred_check
      _
    $region7: #{tpu_custom_call.1} parent=1 // pred_check_branch
      %20 = sbr.rel (0) target = $region9
    $region8: #{tpu_custom_call.1} parent=1 // pred_region
      %22 = vsyncadd [#allocation3], 0
      %s23 = sshll.u32 %s1, 4
      %s24 = int_to_ptr.hbm [resolvable:$true] %s23
      %s25 = sshll.u32 [#allocation6], 4
      %s26 = int_to_ptr.vmem [resolvable:$true] %s25
      %31 = dma.hbm_to_vmem [thread:$0]  %s24, 256, %s26, [#allocation3], 128, 128, 8
    $region9: #{tpu_custom_call.1} parent=1 // pred_fallthru
      _
    // Predicated region
    $region10: #{tpu_custom_call.1} parent=1 // pred_check
      _
    $region11: #{tpu_custom_call.1} parent=1 // pred_check_branch
      %33 = sbr.rel (0) target = $region13
    $region12: #{tpu_custom_call.1} parent=1 // pred_region
      %35 = dma.done [#allocation5], 16
    $region13: #{tpu_custom_call.1} parent=1 // pred_fallthru
      _
    // Predicated region
    $region14: #{tpu_custom_call.1} parent=1 // pred_check
      _
    $region15: #{tpu_custom_call.1} parent=1 // pred_check_branch
      %37 = sbr.rel (0) target = $region17
    $region16: #{tpu_custom_call.1} parent=1 // pred_region
      %39 = dma.done [#allocation3], 256
    $region17: #{tpu_custom_call.1} parent=1 // pred_fallthru
      _
    %40 = sfence
    %s41 = sld [smem:[#allocation2]]
    %s42 = sld [smem:[#allocation2 + $0x1]]
    %s43 = sld [smem:[#allocation2 + $0x2]]
    %s44 = sld [smem:[#allocation2 + $0x3]]
    %v45 = vld [vmem:[#allocation6] sm:$0xff]
    %v46 = vld [vmem:[#allocation6 + $0x8] sm:$0xff]
    %v47 = vstv %s42
    %v48 = vmul.f32 %v47, %v45
    %v49 = vmul.f32 %v47, %v46
    %v50 = vstv %s43
    %v51 = vadd.f32 %v48, %v50
    %v52 = vadd.f32 %v49, %v50
    %v53 = vand.u32 2147483647, %v51
    %vm54 = vcmp.le.f32.partialorder %v53, 0.7853982
    %vm55 = vcmp.lt.s32.totalorder %v51, 0
    %v56 = vand.u32 %v51, 2139095040
    %v57 = vshrl.u32 %v56, 23
    %v58 = vsub.s32 %v57, 127
    %v59 = vand.u32 2147483647, %v51
    %v60 = vand.u32 %v59, 8388607
    %v61 = vor.u32 %v60, 8388608
    %v62 = vsub.s32 0, %v61
    %v63 = vadd.s32 %v58, 1
    %vm64 = vcmp.gt.s32.totalorder %v63, 0
    %v65 = vsel %vm64, %v63, 0
    %v66 = vshrl.u32 %v65, 5
    %v67 = vand.u32 %v65, 31
    %v68 = vsub.s32 32, %v67
    %v69 = vshrl.u32 683565275, %v68
    %v70 = vshll.u32 683565275, %v67
    %v71 = vshrl.u32 2475754826, %v68
    %v72 = vor.u32 %v70, %v71
    %v73 = vshll.u32 2475754826, %v67
    %v74 = vshrl.u32 2131351028, %v68
    %v75 = vor.u32 %v73, %v74
    %v76 = vshll.u32 2131351028, %v67
    %v77 = vshrl.u32 2102212464, %v68
    %v78 = vor.u32 %v76, %v77
    %v79 = vshll.u32 2102212464, %v67
    %v80 = vshrl.u32 920167782, %v68
    %v81 = vor.u32 %v79, %v80
    %v82 = vshll.u32 920167782, %v67
    %v83 = vshrl.u32 1326507024, %v68
    %v84 = vor.u32 %v82, %v83
    %vm85 = vcmp.lt.s32.totalorder %v66, 1
    %vm86 = vcmp.lt.s32.totalorder %v66, 2
    %vm87 = vcmp.lt.s32.totalorder %v66, 3
    %vm88 = vcmp.lt.s32.totalorder %v66, 4
    %v89 = vsel %vm85, %v69, %v72
    %v90 = vsel %vm88, %v78, 2102212464
    %v91 = vsel %vm87, %v75, %v90
    %v92 = vsel %vm86, %v89, %v91
    %v93 = vsel %vm85, %v72, %v75
    %v94 = vsel %vm88, %v81, 920167782
    %v95 = vsel %vm87, %v78, %v94
    %v96 = vsel %vm86, %v93, %v95
    %v97 = vsel %vm85, %v75, %v78
    %v98 = vsel %vm88, %v84, 1326507024
    %v99 = vsel %vm87, %v81, %v98
    %v100 = vsel %vm86, %v97, %v99
    %v101 = vshll.u32 %v61, 8
    %v102 = vand.u32 %v101, 65535
    %v103 = vshrl.u32 %v101, 16
    %v104 = vand.u32 %v100, 65535
    %v105 = vshrl.u32 %v100, 16
    %v106 = vmul.u32 %v102, %v104
    %v107 = vmul.u32 %v102, %v105
    %v108 = vmul.u32 %v103, %v104
    %v109 = vmul.u32 %v103, %v105
    %v110 = vshll.u32 %v107, 16
    %v111 = vshrl.u32 %v107, 16
    %v112 = vshll.u32 %v108, 16
    %v113 = vshrl.u32 %v108, 16
    %vm114 = vc.u32 %v106, %v110
    %v115 = vsel %vm114, 1, 0
    %v116 = vadd.s32 %v106, %v110
    %v117 = vadd.s32 %v109, %v115
    %vm118 = vc.u32 %v116, %v112
    %v119 = vsel %vm118, 1, 0
    %v120 = vadd.s32 %v116, %v112
    %v121 = vadd.s32 %v117, %v119
    %v122 = vadd.s32 %v121, %v111
    %v123 = vadd.s32 %v122, %v113
    %v124 = vand.u32 %v101, 65535
    %v125 = vshrl.u32 %v101, 16
    %v126 = vand.u32 %v96, 65535
    %v127 = vshrl.u32 %v96, 16
    %v128 = vmul.u32 %v124, %v126
    %v129 = vmul.u32 %v124, %v127
    %v130 = vmul.u32 %v125, %v126
    %v131 = vmul.u32 %v125, %v127
    %v132 = vshll.u32 %v129, 16
    %v133 = vshrl.u32 %v129, 16
    %v134 = vshll.u32 %v130, 16
    %v135 = vshrl.u32 %v130, 16
    %vm136 = vc.u32 %v128, %v132
    %v137 = vsel %vm136, 1, 0
    %v138 = vadd.s32 %v128, %v132
    %v139 = vadd.s32 %v131, %v137
    %vm140 = vc.u32 %v138, %v134
    %v141 = vsel %vm140, 1, 0
    %v142 = vadd.s32 %v138, %v134
    %v143 = vadd.s32 %v139, %v141
    %v144 = vadd.s32 %v143, %v133
    %v145 = vadd.s32 %v144, %v135
    %v146 = vmul.u32 %v101, %v92
    %v147 = vadd.s32 %v123, %v142
    %vm148 = vc.u32 %v123, %v142
    %v149 = vadd.s32 %v145, 1
    %v150 = vsel %vm148, %v149, %v145
    %v151 = vadd.s32 %v146, %v150
    %v152 = vadd.s32 %v151, 536870912
    %v153 = vshrl.u32 %v152, 30
    %v154 = vshll.u32 %v153, 30
    %v155 = vsub.s32 %v151, %v154
    %vm156 = vcmp.lt.s32.totalorder %v155, 0
    %v157 = vsub.s32 0, %v155
    %v158 = vsel %vm156, %v157, %v155
    %v159 = vclz %v158
    %v160 = vsub.s32 %v159, 2
    %vm161 = vcmp.gt.s32.totalorder 0, %v160
    %v162 = vsel %vm161, 0, %v160
    %v163 = vsub.s32 32, %v162
    %v164 = vshll.u32 %v155, %v162
    %v165 = vshrl.u32 %v147, %v163
    %v166 = vor.u32 %v164, %v165
    %v167 = vsub.s32 4294967266, %v162
    %v168 = vadd.s32 %v167, 127
    %v169 = vshll.u32 %v168, 23
    %v170 = vor.u32 4788187, %v169
    %v171 = vand.u32 2147483647, %v170
    %v173 = vcvt.s32.f32 %v166
    %v174 = vmul.f32 %v173, %v171
    %v175 = vxor.u32 %v174, 2147483648
    %v176 = vsel %vm55, %v175, %v174
    %v177 = vsub.s32 4, %v153
    %v178 = vsel %vm55, %v177, %v153
    %v179 = vsel %vm54, %v51, %v176
    %v180 = vsel %vm54, 0, %v178
    %v181 = vmul.f32 %v179, %v179
    %v182 = vmul.f32 %v181, -0.001358992
    %v183 = vadd.f32 %v182, 0.041655596
    %v184 = vmul.f32 %v181, %v183
    %v185 = vadd.f32 %v184, -0.4999988
    %v186 = vmul.f32 %v181, %v185
    %v187 = vadd.f32 1.0, %v186
    %v188 = vmul.f32 %v179, %v179
    %v189 = vmul.f32 %v188, -0.00019511016
    %v190 = vadd.f32 %v189, 0.008332121
    %v191 = vmul.f32 %v188, %v190
    %v192 = vadd.f32 %v191, -0.16666654
    %v193 = vmul.f32 %v188, %v192
    %v194 = vadd.f32 %v193, 1.0
    %v195 = vmul.f32 %v194, %v179
    %vm196 = vweird.f32 %v51
    %v197 = vadd.s32 %v180, 3
    %v198 = vand.u32 %v197, 3
    %vm199 = vcmp.lt.s32.totalorder %v198, 2
    %vm200 = vcmp.eq.s32.totalorder %v198, 0
    %v201 = vxor.u32 %v195, 2147483648
    %v202 = vsel %vm200, %v187, %v201
    %vm203 = vcmp.eq.s32.totalorder %v198, 2
    %v204 = vxor.u32 %v187, 2147483648
    %v205 = vsel %vm203, %v204, %v195
    %v206 = vsel %vm199, %v202, %v205
    %v207 = vsel %vm196, nan, %v206
    %v208 = vand.u32 2147483647, %v52
    %vm209 = vcmp.le.f32.partialorder %v208, 0.7853982
    %vm210 = vcmp.lt.s32.totalorder %v52, 0
    %v211 = vand.u32 %v52, 2139095040
    %v212 = vshrl.u32 %v211, 23
    %v213 = vsub.s32 %v212, 127
    %v214 = vand.u32 2147483647, %v52
    %v215 = vand.u32 %v214, 8388607
    %v216 = vor.u32 %v215, 8388608
    %v217 = vsub.s32 0, %v216
    %v218 = vadd.s32 %v213, 1
    %vm219 = vcmp.gt.s32.totalorder %v218, 0
    %v220 = vsel %vm219, %v218, 0
    %v221 = vshrl.u32 %v220, 5
    %v222 = vand.u32 %v220, 31
    %v223 = vsub.s32 32, %v222
    %v224 = vshrl.u32 683565275, %v223
    %v225 = vshll.u32 683565275, %v222
    %v226 = vshrl.u32 2475754826, %v223
    %v227 = vor.u32 %v225, %v226
    %v228 = vshll.u32 2475754826, %v222
    %v229 = vshrl.u32 2131351028, %v223
    %v230 = vor.u32 %v228, %v229
    %v231 = vshll.u32 2131351028, %v222
    %v232 = vshrl.u32 2102212464, %v223
    %v233 = vor.u32 %v231, %v232
    %v234 = vshll.u32 2102212464, %v222
    %v235 = vshrl.u32 920167782, %v223
    %v236 = vor.u32 %v234, %v235
    %v237 = vshll.u32 920167782, %v222
    %v238 = vshrl.u32 1326507024, %v223
    %v239 = vor.u32 %v237, %v238
    %vm240 = vcmp.lt.s32.totalorder %v221, 1
    %vm241 = vcmp.lt.s32.totalorder %v221, 2
    %vm242 = vcmp.lt.s32.totalorder %v221, 3
    %vm243 = vcmp.lt.s32.totalorder %v221, 4
    %v244 = vsel %vm240, %v224, %v227
    %v245 = vsel %vm243, %v233, 2102212464
    %v246 = vsel %vm242, %v230, %v245
    %v247 = vsel %vm241, %v244, %v246
    %v248 = vsel %vm240, %v227, %v230
    %v249 = vsel %vm243, %v236, 920167782
    %v250 = vsel %vm242, %v233, %v249
    %v251 = vsel %vm241, %v248, %v250
    %v252 = vsel %vm240, %v230, %v233
    %v253 = vsel %vm243, %v239, 1326507024
    %v254 = vsel %vm242, %v236, %v253
    %v255 = vsel %vm241, %v252, %v254
    %v256 = vshll.u32 %v216, 8
    %v257 = vand.u32 %v256, 65535
    %v258 = vshrl.u32 %v256, 16
    %v259 = vand.u32 %v255, 65535
    %v260 = vshrl.u32 %v255, 16
    %v261 = vmul.u32 %v257, %v259
    %v262 = vmul.u32 %v257, %v260
    %v263 = vmul.u32 %v258, %v259
    %v264 = vmul.u32 %v258, %v260
    %v265 = vshll.u32 %v262, 16
    %v266 = vshrl.u32 %v262, 16
    %v267 = vshll.u32 %v263, 16
    %v268 = vshrl.u32 %v263, 16
    %vm269 = vc.u32 %v261, %v265
    %v270 = vsel %vm269, 1, 0
    %v271 = vadd.s32 %v261, %v265
    %v272 = vadd.s32 %v264, %v270
    %vm273 = vc.u32 %v271, %v267
    %v274 = vsel %vm273, 1, 0
    %v275 = vadd.s32 %v271, %v267
    %v276 = vadd.s32 %v272, %v274
    %v277 = vadd.s32 %v276, %v266
    %v278 = vadd.s32 %v277, %v268
    %v279 = vand.u32 %v256, 65535
    %v280 = vshrl.u32 %v256, 16
    %v281 = vand.u32 %v251, 65535
    %v282 = vshrl.u32 %v251, 16
    %v283 = vmul.u32 %v279, %v281
    %v284 = vmul.u32 %v279, %v282
    %v285 = vmul.u32 %v280, %v281
    %v286 = vmul.u32 %v280, %v282
    %v287 = vshll.u32 %v284, 16
    %v288 = vshrl.u32 %v284, 16
    %v289 = vshll.u32 %v285, 16
    %v290 = vshrl.u32 %v285, 16
    %vm291 = vc.u32 %v283, %v287
    %v292 = vsel %vm291, 1, 0
    %v293 = vadd.s32 %v283, %v287
    %v294 = vadd.s32 %v286, %v292
    %vm295 = vc.u32 %v293, %v289
    %v296 = vsel %vm295, 1, 0
    %v297 = vadd.s32 %v293, %v289
    %v298 = vadd.s32 %v294, %v296
    %v299 = vadd.s32 %v298, %v288
    %v300 = vadd.s32 %v299, %v290
    %v301 = vmul.u32 %v256, %v247
    %v302 = vadd.s32 %v278, %v297
    %vm303 = vc.u32 %v278, %v297
    %v304 = vadd.s32 %v300, 1
    %v305 = vsel %vm303, %v304, %v300
    %v306 = vadd.s32 %v301, %v305
    %v307 = vadd.s32 %v306, 536870912
    %v308 = vshrl.u32 %v307, 30
    %v309 = vshll.u32 %v308, 30
    %v310 = vsub.s32 %v306, %v309
    %vm311 = vcmp.lt.s32.totalorder %v310, 0
    %v312 = vsub.s32 0, %v310
    %v313 = vsel %vm311, %v312, %v310
    %v314 = vclz %v313
    %v315 = vsub.s32 %v314, 2
    %vm316 = vcmp.gt.s32.totalorder 0, %v315
    %v317 = vsel %vm316, 0, %v315
    %v318 = vsub.s32 32, %v317
    %v319 = vshll.u32 %v310, %v317
    %v320 = vshrl.u32 %v302, %v318
    %v321 = vor.u32 %v319, %v320
    %v322 = vsub.s32 4294967266, %v317
    %v323 = vadd.s32 %v322, 127
    %v324 = vshll.u32 %v323, 23
    %v325 = vor.u32 4788187, %v324
    %v326 = vand.u32 2147483647, %v325
    %v328 = vcvt.s32.f32 %v321
    %v329 = vmul.f32 %v328, %v326
    %v330 = vxor.u32 %v329, 2147483648
    %v331 = vsel %vm210, %v330, %v329
    %v332 = vsub.s32 4, %v308
    %v333 = vsel %vm210, %v332, %v308
    %v334 = vsel %vm209, %v52, %v331
    %v335 = vsel %vm209, 0, %v333
    %v336 = vmul.f32 %v334, %v334
    %v337 = vmul.f32 %v336, -0.001358992
    %v338 = vadd.f32 %v337, 0.041655596
    %v339 = vmul.f32 %v336, %v338
    %v340 = vadd.f32 %v339, -0.4999988
    %v341 = vmul.f32 %v336, %v340
    %v342 = vadd.f32 1.0, %v341
    %v343 = vmul.f32 %v334, %v334
    %v344 = vmul.f32 %v343, -0.00019511016
    %v345 = vadd.f32 %v344, 0.008332121
    %v346 = vmul.f32 %v343, %v345
    %v347 = vadd.f32 %v346, -0.16666654
    %v348 = vmul.f32 %v343, %v347
    %v349 = vadd.f32 %v348, 1.0
    %v350 = vmul.f32 %v349, %v334
    %vm351 = vweird.f32 %v52
    %v352 = vadd.s32 %v335, 3
    %v353 = vand.u32 %v352, 3
    %vm354 = vcmp.lt.s32.totalorder %v353, 2
    %vm355 = vcmp.eq.s32.totalorder %v353, 0
    %v356 = vxor.u32 %v350, 2147483648
    %v357 = vsel %vm355, %v342, %v356
    %vm358 = vcmp.eq.s32.totalorder %v353, 2
    %v359 = vxor.u32 %v342, 2147483648
    %v360 = vsel %vm358, %v359, %v350
    %v361 = vsel %vm354, %v357, %v360
    %v362 = vsel %vm351, nan, %v361
    %v363 = vstv %s41
    %v364 = vmul.f32 %v363, %v207
    %v365 = vmul.f32 %v363, %v362
    %v366 = vstv %s44
    %v367 = vadd.f32 %v364, %v366
    %v368 = vadd.f32 %v365, %v366
    %369 = vst [vmem:[#allocation7] sm:$0xff] %v367
    %370 = vst [vmem:[#allocation7 + $0x8] sm:$0xff] %v368
    // Predicated region
    $region18: #{tpu_custom_call.1} parent=1 // pred_check
      _
    $region19: #{tpu_custom_call.1} parent=1 // pred_check_branch
      %372 = sbr.rel (0) target = $region21
    $region20: #{tpu_custom_call.1} parent=1 // pred_region
      %374 = vsyncadd [#allocation4], 0
      %s375 = sshll.u32 [#allocation7], 4
      %s376 = int_to_ptr.vmem [resolvable:$true] %s375
      %s377 = sshll.u32 %s2, 4
      %s378 = int_to_ptr.hbm [resolvable:$true] %s377
      %383 = dma.vmem_to_hbm [thread:$0]  %s376, 256, %s378, [#allocation4], 128, 128, 8
    $region21: #{tpu_custom_call.1} parent=1 // pred_fallthru
      _
    // Predicated region
    $region22: #{tpu_custom_call.1} parent=1 // pred_check
      _
    $region23: #{tpu_custom_call.1} parent=1 // pred_check_branch
      %385 = sbr.rel (0) target = $region25
    $region24: #{tpu_custom_call.1} parent=1 // pred_region
      %387 = dma.done [#allocation4], 256
    $region25: #{tpu_custom_call.1} parent=1 // pred_fallthru
      _
    %388 = vsyncpa [#allocation3], 1
    %389 = vsyncpa [#allocation4], 1
    %390 = vsyncpa [#allocation5], 1

</llo_original>
